<compile_context>
chip_gen: v7x
topology: tpu7x:2x2x1
jax: 0.10.0
libtpu: 0.0.40
codegen_flags: <defaults>
</compile_context>

<pallas_src>
import jax
import jax.numpy as jnp
from jax.experimental import pallas as pl
from jax.experimental.pallas import tpu as pltpu


def _make_mlp_kernel(num_layers):
    """Fused MLP kernel.

    Ref order: obs (bt, obs_dim) in native layout;
               layer 0:              W_0 (h0, obs_dim), b_0 (h0, 1);
               hidden layers 0<i<L-1: W_i (out, in),    b_i (out, 1);
               last layer:           w_L (h_last, 1),   b_L (1, 1);
               out (1, bt).
    """

    def kernel(obs_ref, *refs):
        out_ref = refs[-1]
        param_refs = refs[:-1]

        # ---- Layer 0: contract over obs_dim straight from the native layout ----
        # (h0, obs_dim) . (bt, obs_dim)^T  -> (h0, bt), batch lands on lanes.
        w0 = param_refs[0][...].astype(jnp.float32)            # (h0, obs_dim)
        b0 = param_refs[1][...].astype(jnp.float32)            # (h0, 1)
        obs = obs_ref[...].astype(jnp.float32)                 # (bt, obs_dim)
        x = jax.lax.dot_general(
            w0, obs,
            dimension_numbers=(((1,), (1,)), ((), ())),
            precision=jax.lax.Precision.HIGHEST,
            preferred_element_type=jnp.float32,
        ) + b0                                                 # (h0, bt)
        x = jnp.maximum(x, 0.0)

        # ---- Hidden layers 1 .. L-2: feature-major W @ x ----
        for i in range(1, num_layers - 1):
            w = param_refs[2 * i][...].astype(jnp.float32)     # (out, in)
            b = param_refs[2 * i + 1][...].astype(jnp.float32) # (out, 1)
            x = jnp.dot(
                w, x,
                precision=jax.lax.Precision.HIGHEST,
                preferred_element_type=jnp.float32,
            ) + b
            x = jnp.maximum(x, 0.0)

        # ---- Final Linear (out_features == 1): VPU multiply + sublane reduce ----
        w_last = param_refs[-2][...].astype(jnp.float32)       # (h_last, 1)
        b_last = param_refs[-1][...].astype(jnp.float32)       # (1, 1)
        out = jnp.sum(x * w_last, axis=0, keepdims=True) + b_last  # (1, bt) lane-dense
        out_ref[...] = out.astype(out_ref.dtype)

    return kernel


def _pick_batch_tile(batch, obs_dim, hidden_sizes, itemsize,
                     target_tile_bytes=4 << 20,
                     vmem_budget_bytes=40 << 20):
    """Pick (batch_tile, num_tiles).

    Tile sized so the obs tile is ~4 MiB and the estimated working set — budgeted
    against the WIDEST layer (activations are (width, bt)) — stays under ~40 MiB,
    which fits v7x's 64 MiB physical VMEM with headroom (vmem_limit set to 48 MiB).
    """
    widest = max([obs_dim] + list(hidden_sizes) + [1])
    # Per batch column: 2x double-buffered obs row (input dtype) + f32 copy of the
    # obs row + ~3 live f32 activation rows of the widest layer.
    per_col = 2 * obs_dim * itemsize + 4 * obs_dim + 3 * 4 * widest
    bt = min(target_tile_bytes // max(1, obs_dim * itemsize),
             vmem_budget_bytes // max(1, per_col))
    bt = max(128, (bt // 128) * 128)

    if batch <= bt:
        # Single tile that exactly matches the array: no padding, no masking.
        return batch, 1

    # Multi-tile: rebalance so per-tile padding stays < 128 rows, and keep the tile
    # count even so v7x's two TensorCores stay load balanced on the parallel axis.
    n = pl.cdiv(batch, bt)
    if n > 1 and n % 2 == 1:
        n += 1
    bt = pl.cdiv(pl.cdiv(batch, n), 128) * 128
    n = pl.cdiv(batch, bt)
    return bt, n


def value_function_forward(obs, params, *, batch_tile=None):
    """Forward pass of the value MLP.

    obs:    (batch, obs_dim) — streamed in its NATIVE layout (no wrapper transpose).
            If upstream provides bf16 obs it is streamed as bf16 (accumulation stays f32).
    params: list of (W, b) in PyTorch-native layout, W: (out_features, in_features),
            b: (out_features,).
    returns (batch, 1).
    """
    batch, obs_dim = obs.shape
    num_layers = len(params)
    assert num_layers >= 2, "value_function requires at least one hidden layer"
    itemsize = jnp.dtype(obs.dtype).itemsize
    hidden_sizes = [int(w.shape[0]) for w, _ in params[:-1]]

    if batch_tile is None:
        bt, n_tiles = _pick_batch_tile(batch, obs_dim, hidden_sizes, itemsize)
    else:
        bt, n_tiles = batch_tile, pl.cdiv(batch, batch_tile)

    padded_out = n_tiles * bt  # output padding only (tiny); obs is never padded

    # Repack params into the kernel layout (tiny tensors; fuses into surrounding jit).
    kernel_params = []
    for i, (w, b) in enumerate(params):
        if i < num_layers - 1:
            kernel_params.append(w)                  # (out, in)
            kernel_params.append(b.reshape(-1, 1))   # (out, 1) — broadcasts over lanes
        else:
            kernel_params.append(w.reshape(-1, 1))   # (h_last, 1) column for VPU reduce
            kernel_params.append(b.reshape(1, 1))    # (1, 1)

    # obs streams with the grid in native layout; params stay resident.
    in_specs = [pl.BlockSpec((bt, obs_dim), lambda i: (i, 0))]
    for arr in kernel_params:
        in_specs.append(pl.BlockSpec(arr.shape, lambda i: (0, 0)))
    out_spec = pl.BlockSpec((1, bt), lambda i: (0, i))
    out_shape = jax.ShapeDtypeStruct((1, padded_out), obs.dtype)

    flops = 2 * batch * sum(int(w.shape[0]) * int(w.shape[1]) for w, _ in params)
    bytes_accessed = int(
        obs.size * itemsize
        + padded_out * itemsize
        + sum(a.size * jnp.dtype(a.dtype).itemsize for a in kernel_params)
    )
    cost = pl.CostEstimate(flops=flops, transcendentals=0, bytes_accessed=bytes_accessed)

    out = pl.pallas_call(
        _make_mlp_kernel(num_layers),
        out_shape=out_shape,
        grid=(n_tiles,),
        in_specs=in_specs,
        out_specs=out_spec,
        compiler_params=pltpu.CompilerParams(
            dimension_semantics=("parallel",),   # shards batch tiles across TCs on v7x
            vmem_limit_bytes=48 << 20,           # fits v7x 64 MiB physical with headroom
        ),
        cost_estimate=cost,
    )(obs, *kernel_params)

    # (1, padded_out) -> (batch, 1); never reduce over padded columns before slicing.
    return out[0, :batch][:, None]


def init_value_function_params(key, obs_dim, hidden_sizes, dtype=jnp.float32):
    """PyTorch-Linear-style init, PyTorch-native layout: W (out, in), b (out,)."""
    sizes = [obs_dim] + list(hidden_sizes) + [1]
    params = []
    for i in range(len(sizes) - 1):
        fan_in, fan_out = sizes[i], sizes[i + 1]
        key, kw, kb = jax.random.split(key, 3)
        bound = 1.0 / (fan_in ** 0.5)
        w = jax.random.uniform(kw, (fan_out, fan_in), dtype, minval=-bound, maxval=bound)
        b = jax.random.uniform(kb, (fan_out,), dtype, minval=-bound, maxval=bound)
        params.append((w, b))
    return params


def _reference_forward(obs, params):
    x = obs.astype(jnp.float32)
    for i, (w, b) in enumerate(params):
        x = jnp.dot(x, w.T, precision=jax.lax.Precision.HIGHEST) + b
        if i < len(params) - 1:
            x = jnp.maximum(x, 0.0)
    return x.astype(obs.dtype)


if __name__ == "__main__":
    # Small shapes consistent with the module: batch=8, obs_dim=32, hidden_sizes=(32, 32).
    batch, obs_dim = 8, 32
    hidden_sizes = (32, 32)

    key = jax.random.PRNGKey(0)
    key, k_obs = jax.random.split(key)
    obs = jax.random.normal(k_obs, (batch, obs_dim), jnp.float32)

    params = init_value_function_params(key, obs_dim, hidden_sizes)

    fwd = jax.jit(value_function_forward)
    out = jax.block_until_ready(fwd(obs, params))

    ref = _reference_forward(obs, params)
    assert out.shape == (batch, 1), out.shape
    assert jnp.allclose(out, ref, atol=1e-5, rtol=1e-5), "mismatch vs reference"

    print("KERNEL_OK")
</pallas_src>

<mosaic_0001>
module attributes {stable_mosaic.version = 11 : i64} {
  func.func @kernel(%arg0: i32, %arg1: memref<8x32xf32, #tpu.memory_space<vmem>>, %arg2: memref<32x32xf32, #tpu.memory_space<vmem>>, %arg3: memref<32x1xf32, #tpu.memory_space<vmem>>, %arg4: memref<32x32xf32, #tpu.memory_space<vmem>>, %arg5: memref<32x1xf32, #tpu.memory_space<vmem>>, %arg6: memref<32x1xf32, #tpu.memory_space<vmem>>, %arg7: memref<1x1xf32, #tpu.memory_space<vmem>>, %arg8: memref<1x8xf32, #tpu.memory_space<vmem>>) attributes {dimension_semantics = [#tpu.dimension_semantics<parallel>], iteration_bounds = array<i64: 1>, scalar_prefetch = 0 : i64, scratch_operands = 0 : i64, tpu.core_type = #tpu.core_type<tc>, window_params = [{transform_indices = @transform_0, window_bounds = array<i64: 8, 32>}, {pipeline_mode = #tpu.pipeline_mode<synchronous>, transform_indices = @transform_1, window_bounds = array<i64: 32, 32>}, {pipeline_mode = #tpu.pipeline_mode<synchronous>, transform_indices = @transform_2, window_bounds = array<i64: 32, 1>}, {pipeline_mode = #tpu.pipeline_mode<synchronous>, transform_indices = @transform_3, window_bounds = array<i64: 32, 32>}, {pipeline_mode = #tpu.pipeline_mode<synchronous>, transform_indices = @transform_4, window_bounds = array<i64: 32, 1>}, {pipeline_mode = #tpu.pipeline_mode<synchronous>, transform_indices = @transform_5, window_bounds = array<i64: 32, 1>}, {pipeline_mode = #tpu.pipeline_mode<synchronous>, transform_indices = @transform_6, window_bounds = array<i64: 1, 1>}, {transform_indices = @transform_7, window_bounds = array<i64: 1, 8>}]} {
    %c0 = arith.constant 0 : index
    %c0_0 = arith.constant 0 : index
    %0 = vector.load %arg2[%c0, %c0_0] : memref<32x32xf32, #tpu.memory_space<vmem>>, vector<32x32xf32>
    %c0_1 = arith.constant 0 : index
    %c0_2 = arith.constant 0 : index
    %1 = vector.load %arg3[%c0_1, %c0_2] : memref<32x1xf32, #tpu.memory_space<vmem>>, vector<32x1xf32>
    %c0_3 = arith.constant 0 : index
    %c0_4 = arith.constant 0 : index
    %2 = vector.load %arg1[%c0_3, %c0_4] : memref<8x32xf32, #tpu.memory_space<vmem>>, vector<8x32xf32>
    %cst = arith.constant dense<0.000000e+00> : vector<32x8xf32>
    %3 = tpu.matmul %0, %2, %cst {dimension_numbers = #tpu.dot_dimension_numbers<[1], [1], [0], [0], [0, 0, 1, 0], [], []>, precision = #tpu.contract_precision<fp32>} : vector<32x32xf32>, vector<8x32xf32>, vector<32x8xf32> -> vector<32x8xf32>
    %4 = vector.broadcast %1 : vector<32x1xf32> to vector<32x8xf32>
    %5 = arith.addf %3, %4 : vector<32x8xf32>
    %cst_5 = arith.constant 0.000000e+00 : f32
    %6 = vector.broadcast %cst_5 : f32 to vector<32x8xf32>
    %7 = arith.maximumf %5, %6 : vector<32x8xf32>
    %c0_6 = arith.constant 0 : index
    %c0_7 = arith.constant 0 : index
    %8 = vector.load %arg4[%c0_6, %c0_7] : memref<32x32xf32, #tpu.memory_space<vmem>>, vector<32x32xf32>
    %c0_8 = arith.constant 0 : index
    %c0_9 = arith.constant 0 : index
    %9 = vector.load %arg5[%c0_8, %c0_9] : memref<32x1xf32, #tpu.memory_space<vmem>>, vector<32x1xf32>
    %cst_10 = arith.constant dense<0.000000e+00> : vector<32x8xf32>
    %10 = tpu.matmul %8, %7, %cst_10 {dimension_numbers = #tpu.dot_dimension_numbers<[1], [0], [0], [1], [0, 0, 1, 1], [], []>, precision = #tpu.contract_precision<fp32>} : vector<32x32xf32>, vector<32x8xf32>, vector<32x8xf32> -> vector<32x8xf32>
    %11 = vector.broadcast %9 : vector<32x1xf32> to vector<32x8xf32>
    %12 = arith.addf %10, %11 : vector<32x8xf32>
    %cst_11 = arith.constant 0.000000e+00 : f32
    %13 = vector.broadcast %cst_11 : f32 to vector<32x8xf32>
    %14 = arith.maximumf %12, %13 : vector<32x8xf32>
    %c0_12 = arith.constant 0 : index
    %c0_13 = arith.constant 0 : index
    %15 = vector.load %arg6[%c0_12, %c0_13] : memref<32x1xf32, #tpu.memory_space<vmem>>, vector<32x1xf32>
    %c0_14 = arith.constant 0 : index
    %c0_15 = arith.constant 0 : index
    %16 = vector.load %arg7[%c0_14, %c0_15] : memref<1x1xf32, #tpu.memory_space<vmem>>, vector<1x1xf32>
    %17 = vector.broadcast %15 : vector<32x1xf32> to vector<32x8xf32>
    %18 = arith.mulf %14, %17 : vector<32x8xf32>
    %cst_16 = arith.constant dense<0.000000e+00> : vector<8xf32>
    %19 = vector.multi_reduction <add>, %18, %cst_16 [0] : vector<32x8xf32> to vector<8xf32>
    %20 = vector.shape_cast %19 : vector<8xf32> to vector<1x8xf32>
    %21 = vector.broadcast %16 : vector<1x1xf32> to vector<1x8xf32>
    %22 = arith.addf %20, %21 : vector<1x8xf32>
    %c0_17 = arith.constant 0 : index
    %c0_18 = arith.constant 0 : index
    %23 = vector.load %arg8[%c0_17, %c0_18] : memref<1x8xf32, #tpu.memory_space<vmem>>, vector<1x8xf32>
    tpu.vector_store %arg8[%c0_17, %c0_18], %22 {strides = array<i32>} : memref<1x8xf32, #tpu.memory_space<vmem>>, vector<1x8xf32>,
    return
  }
  func.func @transform_0(%arg0: i32) -> (i32, i32) {
    %c0_i32 = arith.constant 0 : i32
    %c0_i32_0 = arith.constant 0 : i32
    return %arg0, %c0_i32 : i32, i32
  }
  func.func @transform_1(%arg0: i32) -> (i32, i32) {
    %c0_i32 = arith.constant 0 : i32
    %c0_i32_0 = arith.constant 0 : i32
    %c0_i32_1 = arith.constant 0 : i32
    return %c0_i32, %c0_i32_0 : i32, i32
  }
  func.func @transform_2(%arg0: i32) -> (i32, i32) {
    %c0_i32 = arith.constant 0 : i32
    %c0_i32_0 = arith.constant 0 : i32
    %c0_i32_1 = arith.constant 0 : i32
    return %c0_i32, %c0_i32_0 : i32, i32
  }
  func.func @transform_3(%arg0: i32) -> (i32, i32) {
    %c0_i32 = arith.constant 0 : i32
    %c0_i32_0 = arith.constant 0 : i32
    %c0_i32_1 = arith.constant 0 : i32
    return %c0_i32, %c0_i32_0 : i32, i32
  }
  func.func @transform_4(%arg0: i32) -> (i32, i32) {
    %c0_i32 = arith.constant 0 : i32
    %c0_i32_0 = arith.constant 0 : i32
    %c0_i32_1 = arith.constant 0 : i32
    return %c0_i32, %c0_i32_0 : i32, i32
  }
  func.func @transform_5(%arg0: i32) -> (i32, i32) {
    %c0_i32 = arith.constant 0 : i32
    %c0_i32_0 = arith.constant 0 : i32
    %c0_i32_1 = arith.constant 0 : i32
    return %c0_i32, %c0_i32_0 : i32, i32
  }
  func.func @transform_6(%arg0: i32) -> (i32, i32) {
    %c0_i32 = arith.constant 0 : i32
    %c0_i32_0 = arith.constant 0 : i32
    %c0_i32_1 = arith.constant 0 : i32
    return %c0_i32, %c0_i32_0 : i32, i32
  }
  func.func @transform_7(%arg0: i32) -> (i32, i32) {
    %c0_i32 = arith.constant 0 : i32
    %c0_i32_0 = arith.constant 0 : i32
    return %c0_i32, %arg0 : i32, i32
  }
}

</mosaic_0001>

<llo_original>
// kernel: value_function_forward.1
$region0: #{value_function_forward.1}
  #allocation0 [shape = 'u32[]', space=smem, size = 0x4, offset = 0x4, fixed_abs, tag = 'smem constant byte address 0x4 - core index']
  #allocation1 [shape = 'u32[144,128]{1,0:T(1,128)}', space=vmem, size = 0x12000, scoped, tag = 'internal scratch']
  #allocation2 [shape = 'f32[1,1]{1,0:T(1,128)S(1)}', space=vmem, size = 0x200, scoped, tag = 'scoped memory for value_function_forward.1']
  %s0 = inlined_call_operand.vmem [shape: f32[8,32], index: 0, kind: input, shape index: {}]
  %s1 = inlined_call_operand.vmem [shape: f32[32,32], index: 1, kind: input, shape index: {}]
  %s2 = inlined_call_operand.vmem [shape: f32[32,1], index: 2, kind: input, shape index: {}]
  %s3 = inlined_call_operand.vmem [shape: f32[32,32], index: 3, kind: input, shape index: {}]
  %s4 = inlined_call_operand.vmem [shape: f32[32,1], index: 4, kind: input, shape index: {}]
  %s5 = inlined_call_operand.vmem [shape: f32[32,1], index: 5, kind: input, shape index: {}]
  %s6 = inlined_call_operand.<no memory space> [shape: f32[1,1], index: 6, kind: input, shape index: {}]
  %s7 = inlined_call_operand.hbm [shape: f32[1,8], index: 7, kind: output, shape index: {}]
  %s8 = sld [smem:[#allocation0]]
  $region38: #{value_function_forward.1} parent=0
    _
  %s10 = ssub.s32 1, %s8
  %s11 = scalar_select 0, %s10, %s8
  %v12 = vstv %s6
  %13 = vst [vmem:[#allocation2] sm:$0x1] %v12
  $region1: #{value_function_forward.1} parent=0
    #allocation3 [shape = 'u8[512]{0}', space=vmem, size = 0x400, scoped, tag = 'output window, operand 0, single buffered']
    #allocation4 [shape = 's32[1]{0}', space=sflag, size = 0x4, scoped, tag = 'scoped memory for value_function_forward.1']
    %14 = vsyncpa [#allocation4], 0
    // Predicated region
    $region2: #{value_function_forward.1} parent=1 // pred_check
      _
    $region3: #{value_function_forward.1} parent=1 // pred_check_branch
      %16 = sbr.rel (0) target = $region5
    $region4: #{value_function_forward.1} parent=1 // pred_region
      _
    $region5: #{value_function_forward.1} parent=1 // pred_fallthru
      _
    // Predicated region
    $region6: #{value_function_forward.1} parent=1 // pred_check
      _
    $region7: #{value_function_forward.1} parent=1 // pred_check_branch
      %18 = sbr.rel (0) target = $region9
    $region8: #{value_function_forward.1} parent=1 // pred_region
      _
    $region9: #{value_function_forward.1} parent=1 // pred_fallthru
      _
    // Predicated region
    $region10: #{value_function_forward.1} parent=1 // pred_check
      _
    $region11: #{value_function_forward.1} parent=1 // pred_check_branch
      %20 = sbr.rel (0) target = $region13
    $region12: #{value_function_forward.1} parent=1 // pred_region
      _
    $region13: #{value_function_forward.1} parent=1 // pred_fallthru
      _
    // Predicated region
    $region14: #{value_function_forward.1} parent=1 // pred_check
      _
    $region15: #{value_function_forward.1} parent=1 // pred_check_branch
      %22 = sbr.rel (0) target = $region17
    $region16: #{value_function_forward.1} parent=1 // pred_region
      _
    $region17: #{value_function_forward.1} parent=1 // pred_fallthru
      _
    // Predicated region
    $region18: #{value_function_forward.1} parent=1 // pred_check
      _
    $region19: #{value_function_forward.1} parent=1 // pred_check_branch
      %24 = sbr.rel (0) target = $region21
    $region20: #{value_function_forward.1} parent=1 // pred_region
      _
    $region21: #{value_function_forward.1} parent=1 // pred_fallthru
      _
    // Predicated region
    $region22: #{value_function_forward.1} parent=1 // pred_check
      _
    $region23: #{value_function_forward.1} parent=1 // pred_check_branch
      %26 = sbr.rel (0) target = $region25
    $region24: #{value_function_forward.1} parent=1 // pred_region
      _
    $region25: #{value_function_forward.1} parent=1 // pred_fallthru
      _
    // Predicated region
    $region26: #{value_function_forward.1} parent=1 // pred_check
      _
    $region27: #{value_function_forward.1} parent=1 // pred_check_branch
      %28 = sbr.rel (0) target = $region29
    $region28: #{value_function_forward.1} parent=1 // pred_region
      _
    $region29: #{value_function_forward.1} parent=1 // pred_fallthru
      _
    %v29 = vld [vmem:[%s1] sm:$0xff]
    %v30 = vld [vmem:[%s1 + $0x8] sm:$0xff]
    %v31 = vld [vmem:[%s1 + $0x10] sm:$0xff]
    %v32 = vld [vmem:[%s1 + $0x18] sm:$0xff]
    %v33 = vld [vmem:[%s2] sm:$0xff]
    %v34 = vld [vmem:[%s2 + $0x8] sm:$0xff]
    %v35 = vld [vmem:[%s2 + $0x10] sm:$0xff]
    %v36 = vld [vmem:[%s2 + $0x18] sm:$0xff]
    %v37 = vld [vmem:[%s0] sm:$0xff]
    %39 = vset.pattern.permute.xlu0 0
    %40 = vperm.xlu0 %39, %v33
    %v41 = vpop.permute.xlu0 %40
    %44 = vset.pattern.permute.xlu0 0
    %45 = vperm.xlu0 %44, %v34
    %v46 = vpop.permute.xlu0 %45
    %49 = vset.pattern.permute.xlu0 0
    %50 = vperm.xlu0 %49, %v35
    %v51 = vpop.permute.xlu0 %50
    %54 = vset.pattern.permute.xlu0 0
    %55 = vperm.xlu0 %54, %v36
    %v56 = vpop.permute.xlu0 %55
    %vm58 = vcmask 261120
    %v60 = vsel %vm58, %v29, 0
    %v63 = vsel %vm58, %v30, 0
    %v66 = vsel %vm58, %v31, 0
    %v69 = vsel %vm58, %v32, 0
    %v72 = vsel %vm58, %v37, 0
    %74 = vmatprep.subr.mxu0 0.0
    %v75 = vand.u32 %v72, 4294901760
    %76 = vmatpush1.xpose.msra.mxu0 %v75
    %77 = vmatprep.subr.mxu0 0.0
    %78 = vmatpush1.xpose.msra.mxu0 0.0
    %79 = vmatprep.subr.mxu0 0.0
    %80 = vmatpush1.xpose.msra.mxu0 0.0
    %81 = vmatprep.subr.mxu0 0.0
    %82 = vmatpush1.xpose.msra.mxu0 0.0
    %83 = vmatprep.subr.mxu0 0.0
    %84 = vmatpush1.xpose.msra.mxu0 0.0
    %85 = vmatprep.subr.mxu0 0.0
    %86 = vmatpush1.xpose.msra.mxu0 0.0
    %87 = vmatprep.subr.mxu0 0.0
    %88 = vmatpush1.xpose.msra.mxu0 0.0
    %89 = vmatprep.subr.mxu0 0.0
    %90 = vmatpush1.xpose.msra.mxu0 0.0
    %91 = vmatprep.subr.mxu0 0.0
    %92 = vmatpush1.xpose.msra.mxu0 0.0
    %93 = vmatprep.subr.mxu0 0.0
    %94 = vmatpush1.xpose.msra.mxu0 0.0
    %95 = vmatprep.subr.mxu0 0.0
    %96 = vmatpush1.xpose.msra.mxu0 0.0
    %97 = vmatprep.subr.mxu0 0.0
    %98 = vmatpush1.xpose.msra.mxu0 0.0
    %99 = vmatprep.subr.mxu0 0.0
    %100 = vmatpush1.xpose.msra.mxu0 0.0
    %101 = vmatprep.subr.mxu0 0.0
    %102 = vmatpush1.xpose.msra.mxu0 0.0
    %103 = vmatprep.subr.mxu0 0.0
    %104 = vmatpush1.xpose.msra.mxu0 0.0
    %105 = vmatprep.subr.mxu0 0.0
    %106 = vmatpush1.xpose.msra.mxu0 0.0
    %107 = vmatprep.subr.mxu0 0.0
    %108 = vmatpush1.xpose.msra.mxu0 0.0
    %109 = vmatprep.subr.mxu0 0.0
    %110 = vmatpush1.xpose.msra.mxu0 0.0
    %111 = vmatprep.subr.mxu0 0.0
    %112 = vmatpush1.xpose.msra.mxu0 0.0
    %113 = vmatprep.subr.mxu0 0.0
    %114 = vmatpush1.xpose.msra.mxu0 0.0
    %115 = vmatprep.subr.mxu0 0.0
    %116 = vmatpush1.xpose.msra.mxu0 0.0
    %117 = vmatprep.subr.mxu0 0.0
    %118 = vmatpush1.xpose.msra.mxu0 0.0
    %119 = vmatprep.subr.mxu0 0.0
    %120 = vmatpush1.xpose.msra.mxu0 0.0
    %121 = vmatprep.subr.mxu0 0.0
    %122 = vmatpush1.xpose.msra.mxu0 0.0
    %123 = vmatprep.subr.mxu0 0.0
    %124 = vmatpush1.xpose.msra.mxu0 0.0
    %125 = vmatprep.subr.mxu0 0.0
    %126 = vmatpush1.xpose.msra.mxu0 0.0
    %127 = vmatprep.subr.mxu0 0.0
    %128 = vmatpush1.xpose.msra.mxu0 0.0
    %129 = vmatprep.subr.mxu0 0.0
    %130 = vmatpush1.xpose.msra.mxu0 0.0
    %131 = vmatprep.subr.mxu0 0.0
    %132 = vmatpush1.xpose.msra.mxu0 0.0
    %133 = vmatprep.subr.mxu0 0.0
    %134 = vmatpush1.xpose.msra.mxu0 0.0
    %135 = vmatprep.subr.mxu0 0.0
    %136 = vmatpush1.xpose.msra.mxu0 0.0
    %137 = vmatprep.subr.mxu0 0.0
    %138 = vmatpush1.xpose.msra.mxu0 0.0
    %139 = vmatprep.mubr.f32.mxu0 0.0
    %v140 = vand.u32 %v60, 4294901760
    %v141 = vsub.f32 %v60, %v140
    %v142 = vand.u32 %v141, 4294901760
    %v143 = vsub.f32 %v141, %v142
    %v144 = vand.u32 %v143, 4294901760
    %145 = vmatmul.mubr.f32.gmra.mrb[0].mxu0 %v144
    %v146 = vpop.f32.mrb[0].mxu0
    %v147 = vadd.f32 %v41, %v146
    %v148 = vpop.f32.mrb[0].mxu0
    %149 = vmatprep.mubr.f32.mxu0 0.0
    %v150 = vand.u32 %v63, 4294901760
    %v151 = vsub.f32 %v63, %v150
    %v152 = vand.u32 %v151, 4294901760
    %v153 = vsub.f32 %v151, %v152
    %v154 = vand.u32 %v153, 4294901760
    %155 = vmatmul.mubr.f32.gmra.mrb[0].mxu0 %v154
    %v156 = vpop.f32.mrb[0].mxu0
    %v157 = vadd.f32 %v46, %v156
    %v158 = vpop.f32.mrb[0].mxu0
    %159 = vmatprep.mubr.f32.mxu0 0.0
    %v160 = vand.u32 %v66, 4294901760
    %v161 = vsub.f32 %v66, %v160
    %v162 = vand.u32 %v161, 4294901760
    %v163 = vsub.f32 %v161, %v162
    %v164 = vand.u32 %v163, 4294901760
    %165 = vmatmul.mubr.f32.gmra.mrb[0].mxu0 %v164
    %v166 = vpop.f32.mrb[0].mxu0
    %v167 = vadd.f32 %v51, %v166
    %v168 = vpop.f32.mrb[0].mxu0
    %169 = vmatprep.mubr.f32.mxu0 0.0
    %v170 = vand.u32 %v69, 4294901760
    %v171 = vsub.f32 %v69, %v170
    %v172 = vand.u32 %v171, 4294901760
    %v173 = vsub.f32 %v171, %v172
    %v174 = vand.u32 %v173, 4294901760
    %175 = vmatmul.mubr.f32.gmra.mrb[0].mxu0 %v174
    %v176 = vpop.f32.mrb[0].mxu0
    %v177 = vadd.f32 %v56, %v176
    %v178 = vpop.f32.mrb[0].mxu0
    %179 = vdwg.mxu0
    %180 = vmatprep.subr.mxu0 0.0
    %v181 = vand.u32 %v72, 4294901760
    %v182 = vsub.f32 %v72, %v181
    %v183 = vand.u32 %v182, 4294901760
    %v184 = vsub.f32 %v182, %v183
    %v185 = vand.u32 %v184, 4294901760
    %186 = vmatpush1.xpose.msra.mxu0 %v185
    %187 = vmatprep.subr.mxu0 0.0
    %188 = vmatpush1.xpose.msra.mxu0 0.0
    %189 = vmatprep.subr.mxu0 0.0
    %190 = vmatpush1.xpose.msra.mxu0 0.0
    %191 = vmatprep.subr.mxu0 0.0
    %192 = vmatpush1.xpose.msra.mxu0 0.0
    %193 = vmatprep.subr.mxu0 0.0
    %194 = vmatpush1.xpose.msra.mxu0 0.0
    %195 = vmatprep.subr.mxu0 0.0
    %196 = vmatpush1.xpose.msra.mxu0 0.0
    %197 = vmatprep.subr.mxu0 0.0
    %198 = vmatpush1.xpose.msra.mxu0 0.0
    %199 = vmatprep.subr.mxu0 0.0
    %200 = vmatpush1.xpose.msra.mxu0 0.0
    %201 = vmatprep.subr.mxu0 0.0
    %202 = vmatpush1.xpose.msra.mxu0 0.0
    %203 = vmatprep.subr.mxu0 0.0
    %204 = vmatpush1.xpose.msra.mxu0 0.0
    %205 = vmatprep.subr.mxu0 0.0
    %206 = vmatpush1.xpose.msra.mxu0 0.0
    %207 = vmatprep.subr.mxu0 0.0
    %208 = vmatpush1.xpose.msra.mxu0 0.0
    %209 = vmatprep.subr.mxu0 0.0
    %210 = vmatpush1.xpose.msra.mxu0 0.0
    %211 = vmatprep.subr.mxu0 0.0
    %212 = vmatpush1.xpose.msra.mxu0 0.0
    %213 = vmatprep.subr.mxu0 0.0
    %214 = vmatpush1.xpose.msra.mxu0 0.0
    %215 = vmatprep.subr.mxu0 0.0
    %216 = vmatpush1.xpose.msra.mxu0 0.0
    %217 = vmatprep.subr.mxu0 0.0
    %218 = vmatpush1.xpose.msra.mxu0 0.0
    %219 = vmatprep.subr.mxu0 0.0
    %220 = vmatpush1.xpose.msra.mxu0 0.0
    %221 = vmatprep.subr.mxu0 0.0
    %222 = vmatpush1.xpose.msra.mxu0 0.0
    %223 = vmatprep.subr.mxu0 0.0
    %224 = vmatpush1.xpose.msra.mxu0 0.0
    %225 = vmatprep.subr.mxu0 0.0
    %226 = vmatpush1.xpose.msra.mxu0 0.0
    %227 = vmatprep.subr.mxu0 0.0
    %228 = vmatpush1.xpose.msra.mxu0 0.0
    %229 = vmatprep.subr.mxu0 0.0
    %230 = vmatpush1.xpose.msra.mxu0 0.0
    %231 = vmatprep.subr.mxu0 0.0
    %232 = vmatpush1.xpose.msra.mxu0 0.0
    %233 = vmatprep.subr.mxu0 0.0
    %234 = vmatpush1.xpose.msra.mxu0 0.0
    %235 = vmatprep.subr.mxu0 0.0
    %236 = vmatpush1.xpose.msra.mxu0 0.0
    %237 = vmatprep.subr.mxu0 0.0
    %238 = vmatpush1.xpose.msra.mxu0 0.0
    %239 = vmatprep.subr.mxu0 0.0
    %240 = vmatpush1.xpose.msra.mxu0 0.0
    %241 = vmatprep.subr.mxu0 0.0
    %242 = vmatpush1.xpose.msra.mxu0 0.0
    %243 = vmatprep.subr.mxu0 0.0
    %244 = vmatpush1.xpose.msra.mxu0 0.0
    %245 = vmatprep.subr.mxu0 0.0
    %246 = vmatpush1.xpose.msra.mxu0 0.0
    %247 = vmatprep.subr.mxu0 0.0
    %248 = vmatpush1.xpose.msra.mxu0 0.0
    %249 = vmatprep.mubr.f32.mxu0 0.0
    %v250 = vand.u32 %v60, 4294901760
    %251 = vmatmul.mubr.f32.gmra.mrb[0].mxu0 %v250
    %v252 = vpop.f32.mrb[0].mxu0
    %v253 = vadd.f32 %v147, %v252
    %v254 = vpop.f32.mrb[0].mxu0
    %255 = vmatprep.mubr.f32.mxu0 0.0
    %v256 = vand.u32 %v63, 4294901760
    %257 = vmatmul.mubr.f32.gmra.mrb[0].mxu0 %v256
    %v258 = vpop.f32.mrb[0].mxu0
    %v259 = vadd.f32 %v157, %v258
    %v260 = vpop.f32.mrb[0].mxu0
    %261 = vmatprep.mubr.f32.mxu0 0.0
    %v262 = vand.u32 %v66, 4294901760
    %263 = vmatmul.mubr.f32.gmra.mrb[0].mxu0 %v262
    %v264 = vpop.f32.mrb[0].mxu0
    %v265 = vadd.f32 %v167, %v264
    %v266 = vpop.f32.mrb[0].mxu0
    %267 = vmatprep.mubr.f32.mxu0 0.0
    %v268 = vand.u32 %v69, 4294901760
    %269 = vmatmul.mubr.f32.gmra.mrb[0].mxu0 %v268
    %v270 = vpop.f32.mrb[0].mxu0
    %v271 = vadd.f32 %v177, %v270
    %v272 = vpop.f32.mrb[0].mxu0
    %273 = vdwg.mxu0
    %274 = vmatprep.subr.mxu0 0.0
    %v275 = vand.u32 %v72, 4294901760
    %v276 = vsub.f32 %v72, %v275
    %277 = vmatpush1.xpose.msra.mxu0 %v276
    %278 = vmatprep.subr.mxu0 0.0
    %279 = vmatpush1.xpose.msra.mxu0 0.0
    %280 = vmatprep.subr.mxu0 0.0
    %281 = vmatpush1.xpose.msra.mxu0 0.0
    %282 = vmatprep.subr.mxu0 0.0
    %283 = vmatpush1.xpose.msra.mxu0 0.0
    %284 = vmatprep.subr.mxu0 0.0
    %285 = vmatpush1.xpose.msra.mxu0 0.0
    %286 = vmatprep.subr.mxu0 0.0
    %287 = vmatpush1.xpose.msra.mxu0 0.0
    %288 = vmatprep.subr.mxu0 0.0
    %289 = vmatpush1.xpose.msra.mxu0 0.0
    %290 = vmatprep.subr.mxu0 0.0
    %291 = vmatpush1.xpose.msra.mxu0 0.0
    %292 = vmatprep.subr.mxu0 0.0
    %293 = vmatpush1.xpose.msra.mxu0 0.0
    %294 = vmatprep.subr.mxu0 0.0
    %295 = vmatpush1.xpose.msra.mxu0 0.0
    %296 = vmatprep.subr.mxu0 0.0
    %297 = vmatpush1.xpose.msra.mxu0 0.0
    %298 = vmatprep.subr.mxu0 0.0
    %299 = vmatpush1.xpose.msra.mxu0 0.0
    %300 = vmatprep.subr.mxu0 0.0
    %301 = vmatpush1.xpose.msra.mxu0 0.0
    %302 = vmatprep.subr.mxu0 0.0
    %303 = vmatpush1.xpose.msra.mxu0 0.0
    %304 = vmatprep.subr.mxu0 0.0
    %305 = vmatpush1.xpose.msra.mxu0 0.0
    %306 = vmatprep.subr.mxu0 0.0
    %307 = vmatpush1.xpose.msra.mxu0 0.0
    %308 = vmatprep.subr.mxu0 0.0
    %309 = vmatpush1.xpose.msra.mxu0 0.0
    %310 = vmatprep.subr.mxu0 0.0
    %311 = vmatpush1.xpose.msra.mxu0 0.0
    %312 = vmatprep.subr.mxu0 0.0
    %313 = vmatpush1.xpose.msra.mxu0 0.0
    %314 = vmatprep.subr.mxu0 0.0
    %315 = vmatpush1.xpose.msra.mxu0 0.0
    %316 = vmatprep.subr.mxu0 0.0
    %317 = vmatpush1.xpose.msra.mxu0 0.0
    %318 = vmatprep.subr.mxu0 0.0
    %319 = vmatpush1.xpose.msra.mxu0 0.0
    %320 = vmatprep.subr.mxu0 0.0
    %321 = vmatpush1.xpose.msra.mxu0 0.0
    %322 = vmatprep.subr.mxu0 0.0
    %323 = vmatpush1.xpose.msra.mxu0 0.0
    %324 = vmatprep.subr.mxu0 0.0
    %325 = vmatpush1.xpose.msra.mxu0 0.0
    %326 = vmatprep.subr.mxu0 0.0
    %327 = vmatpush1.xpose.msra.mxu0 0.0
    %328 = vmatprep.subr.mxu0 0.0
    %329 = vmatpush1.xpose.msra.mxu0 0.0
    %330 = vmatprep.subr.mxu0 0.0
    %331 = vmatpush1.xpose.msra.mxu0 0.0
    %332 = vmatprep.subr.mxu0 0.0
    %333 = vmatpush1.xpose.msra.mxu0 0.0
    %334 = vmatprep.subr.mxu0 0.0
    %335 = vmatpush1.xpose.msra.mxu0 0.0
    %336 = vmatprep.subr.mxu0 0.0
    %337 = vmatpush1.xpose.msra.mxu0 0.0
    %338 = vmatprep.subr.mxu0 0.0
    %339 = vmatpush1.xpose.msra.mxu0 0.0
    %340 = vmatprep.mubr.f32.mxu0 0.0
    %v341 = vand.u32 %v60, 4294901760
    %v342 = vsub.f32 %v60, %v341
    %343 = vmatmul.mubr.f32.gmra.mrb[0].mxu0 %v342
    %v344 = vpop.f32.mrb[0].mxu0
    %v345 = vadd.f32 %v253, %v344
    %v346 = vpop.f32.mrb[0].mxu0
    %347 = vmatprep.mubr.f32.mxu0 0.0
    %v348 = vand.u32 %v63, 4294901760
    %v349 = vsub.f32 %v63, %v348
    %350 = vmatmul.mubr.f32.gmra.mrb[0].mxu0 %v349
    %v351 = vpop.f32.mrb[0].mxu0
    %v352 = vadd.f32 %v259, %v351
    %v353 = vpop.f32.mrb[0].mxu0
    %354 = vmatprep.mubr.f32.mxu0 0.0
    %v355 = vand.u32 %v66, 4294901760
    %v356 = vsub.f32 %v66, %v355
    %357 = vmatmul.mubr.f32.gmra.mrb[0].mxu0 %v356
    %v358 = vpop.f32.mrb[0].mxu0
    %v359 = vadd.f32 %v265, %v358
    %v360 = vpop.f32.mrb[0].mxu0
    %361 = vmatprep.mubr.f32.mxu0 0.0
    %v362 = vand.u32 %v69, 4294901760
    %v363 = vsub.f32 %v69, %v362
    %364 = vmatmul.mubr.f32.gmra.mrb[0].mxu0 %v363
    %v365 = vpop.f32.mrb[0].mxu0
    %v366 = vadd.f32 %v271, %v365
    %v367 = vpop.f32.mrb[0].mxu0
    %368 = vdwg.mxu0
    %369 = vmatprep.subr.mxu0 0.0
    %v370 = vand.u32 %v72, 4294901760
    %371 = vmatpush1.xpose.msra.mxu0 %v370
    %372 = vmatprep.subr.mxu0 0.0
    %373 = vmatpush1.xpose.msra.mxu0 0.0
    %374 = vmatprep.subr.mxu0 0.0
    %375 = vmatpush1.xpose.msra.mxu0 0.0
    %376 = vmatprep.subr.mxu0 0.0
    %377 = vmatpush1.xpose.msra.mxu0 0.0
    %378 = vmatprep.subr.mxu0 0.0
    %379 = vmatpush1.xpose.msra.mxu0 0.0
    %380 = vmatprep.subr.mxu0 0.0
    %381 = vmatpush1.xpose.msra.mxu0 0.0
    %382 = vmatprep.subr.mxu0 0.0
    %383 = vmatpush1.xpose.msra.mxu0 0.0
    %384 = vmatprep.subr.mxu0 0.0
    %385 = vmatpush1.xpose.msra.mxu0 0.0
    %386 = vmatprep.subr.mxu0 0.0
    %387 = vmatpush1.xpose.msra.mxu0 0.0
    %388 = vmatprep.subr.mxu0 0.0
    %389 = vmatpush1.xpose.msra.mxu0 0.0
    %390 = vmatprep.subr.mxu0 0.0
    %391 = vmatpush1.xpose.msra.mxu0 0.0
    %392 = vmatprep.subr.mxu0 0.0
    %393 = vmatpush1.xpose.msra.mxu0 0.0
    %394 = vmatprep.subr.mxu0 0.0
    %395 = vmatpush1.xpose.msra.mxu0 0.0
    %396 = vmatprep.subr.mxu0 0.0
    %397 = vmatpush1.xpose.msra.mxu0 0.0
    %398 = vmatprep.subr.mxu0 0.0
    %399 = vmatpush1.xpose.msra.mxu0 0.0
    %400 = vmatprep.subr.mxu0 0.0
    %401 = vmatpush1.xpose.msra.mxu0 0.0
    %402 = vmatprep.subr.mxu0 0.0
    %403 = vmatpush1.xpose.msra.mxu0 0.0
    %404 = vmatprep.subr.mxu0 0.0
    %405 = vmatpush1.xpose.msra.mxu0 0.0
    %406 = vmatprep.subr.mxu0 0.0
    %407 = vmatpush1.xpose.msra.mxu0 0.0
    %408 = vmatprep.subr.mxu0 0.0
    %409 = vmatpush1.xpose.msra.mxu0 0.0
    %410 = vmatprep.subr.mxu0 0.0
    %411 = vmatpush1.xpose.msra.mxu0 0.0
    %412 = vmatprep.subr.mxu0 0.0
    %413 = vmatpush1.xpose.msra.mxu0 0.0
    %414 = vmatprep.subr.mxu0 0.0
    %415 = vmatpush1.xpose.msra.mxu0 0.0
    %416 = vmatprep.subr.mxu0 0.0
    %417 = vmatpush1.xpose.msra.mxu0 0.0
    %418 = vmatprep.subr.mxu0 0.0
    %419 = vmatpush1.xpose.msra.mxu0 0.0
    %420 = vmatprep.subr.mxu0 0.0
    %421 = vmatpush1.xpose.msra.mxu0 0.0
    %422 = vmatprep.subr.mxu0 0.0
    %423 = vmatpush1.xpose.msra.mxu0 0.0
    %424 = vmatprep.subr.mxu0 0.0
    %425 = vmatpush1.xpose.msra.mxu0 0.0
    %426 = vmatprep.subr.mxu0 0.0
    %427 = vmatpush1.xpose.msra.mxu0 0.0
    %428 = vmatprep.subr.mxu0 0.0
    %429 = vmatpush1.xpose.msra.mxu0 0.0
    %430 = vmatprep.subr.mxu0 0.0
    %431 = vmatpush1.xpose.msra.mxu0 0.0
    %432 = vmatprep.subr.mxu0 0.0
    %433 = vmatpush1.xpose.msra.mxu0 0.0
    %434 = vmatprep.mubr.f32.mxu0 0.0
    %v435 = vand.u32 %v60, 4294901760
    %v436 = vsub.f32 %v60, %v435
    %v437 = vand.u32 %v436, 4294901760
    %438 = vmatmul.mubr.f32.gmra.mrb[0].mxu0 %v437
    %v439 = vpop.f32.mrb[0].mxu0
    %v440 = vadd.f32 %v345, %v439
    %v441 = vpop.f32.mrb[0].mxu0
    %442 = vmatprep.mubr.f32.mxu0 0.0
    %v443 = vand.u32 %v63, 4294901760
    %v444 = vsub.f32 %v63, %v443
    %v445 = vand.u32 %v444, 4294901760
    %446 = vmatmul.mubr.f32.gmra.mrb[0].mxu0 %v445
    %v447 = vpop.f32.mrb[0].mxu0
    %v448 = vadd.f32 %v352, %v447
    %v449 = vpop.f32.mrb[0].mxu0
    %450 = vmatprep.mubr.f32.mxu0 0.0
    %v451 = vand.u32 %v66, 4294901760
    %v452 = vsub.f32 %v66, %v451
    %v453 = vand.u32 %v452, 4294901760
    %454 = vmatmul.mubr.f32.gmra.mrb[0].mxu0 %v453
    %v455 = vpop.f32.mrb[0].mxu0
    %v456 = vadd.f32 %v359, %v455
    %v457 = vpop.f32.mrb[0].mxu0
    %458 = vmatprep.mubr.f32.mxu0 0.0
    %v459 = vand.u32 %v69, 4294901760
    %v460 = vsub.f32 %v69, %v459
    %v461 = vand.u32 %v460, 4294901760
    %462 = vmatmul.mubr.f32.gmra.mrb[0].mxu0 %v461
    %v463 = vpop.f32.mrb[0].mxu0
    %v464 = vadd.f32 %v366, %v463
    %v465 = vpop.f32.mrb[0].mxu0
    %466 = vdwg.mxu0
    %467 = vmatprep.subr.mxu0 0.0
    %v468 = vand.u32 %v72, 4294901760
    %v469 = vsub.f32 %v72, %v468
    %v470 = vand.u32 %v469, 4294901760
    %471 = vmatpush1.xpose.msra.mxu0 %v470
    %472 = vmatprep.subr.mxu0 0.0
    %473 = vmatpush1.xpose.msra.mxu0 0.0
    %474 = vmatprep.subr.mxu0 0.0
    %475 = vmatpush1.xpose.msra.mxu0 0.0
    %476 = vmatprep.subr.mxu0 0.0
    %477 = vmatpush1.xpose.msra.mxu0 0.0
    %478 = vmatprep.subr.mxu0 0.0
    %479 = vmatpush1.xpose.msra.mxu0 0.0
    %480 = vmatprep.subr.mxu0 0.0
    %481 = vmatpush1.xpose.msra.mxu0 0.0
    %482 = vmatprep.subr.mxu0 0.0
    %483 = vmatpush1.xpose.msra.mxu0 0.0
    %484 = vmatprep.subr.mxu0 0.0
    %485 = vmatpush1.xpose.msra.mxu0 0.0
    %486 = vmatprep.subr.mxu0 0.0
    %487 = vmatpush1.xpose.msra.mxu0 0.0
    %488 = vmatprep.subr.mxu0 0.0
    %489 = vmatpush1.xpose.msra.mxu0 0.0
    %490 = vmatprep.subr.mxu0 0.0
    %491 = vmatpush1.xpose.msra.mxu0 0.0
    %492 = vmatprep.subr.mxu0 0.0
    %493 = vmatpush1.xpose.msra.mxu0 0.0
    %494 = vmatprep.subr.mxu0 0.0
    %495 = vmatpush1.xpose.msra.mxu0 0.0
    %496 = vmatprep.subr.mxu0 0.0
    %497 = vmatpush1.xpose.msra.mxu0 0.0
    %498 = vmatprep.subr.mxu0 0.0
    %499 = vmatpush1.xpose.msra.mxu0 0.0
    %500 = vmatprep.subr.mxu0 0.0
    %501 = vmatpush1.xpose.msra.mxu0 0.0
    %502 = vmatprep.subr.mxu0 0.0
    %503 = vmatpush1.xpose.msra.mxu0 0.0
    %504 = vmatprep.subr.mxu0 0.0
    %505 = vmatpush1.xpose.msra.mxu0 0.0
    %506 = vmatprep.subr.mxu0 0.0
    %507 = vmatpush1.xpose.msra.mxu0 0.0
    %508 = vmatprep.subr.mxu0 0.0
    %509 = vmatpush1.xpose.msra.mxu0 0.0
    %510 = vmatprep.subr.mxu0 0.0
    %511 = vmatpush1.xpose.msra.mxu0 0.0
    %512 = vmatprep.subr.mxu0 0.0
    %513 = vmatpush1.xpose.msra.mxu0 0.0
    %514 = vmatprep.subr.mxu0 0.0
    %515 = vmatpush1.xpose.msra.mxu0 0.0
    %516 = vmatprep.subr.mxu0 0.0
    %517 = vmatpush1.xpose.msra.mxu0 0.0
    %518 = vmatprep.subr.mxu0 0.0
    %519 = vmatpush1.xpose.msra.mxu0 0.0
    %520 = vmatprep.subr.mxu0 0.0
    %521 = vmatpush1.xpose.msra.mxu0 0.0
    %522 = vmatprep.subr.mxu0 0.0
    %523 = vmatpush1.xpose.msra.mxu0 0.0
    %524 = vmatprep.subr.mxu0 0.0
    %525 = vmatpush1.xpose.msra.mxu0 0.0
    %526 = vmatprep.subr.mxu0 0.0
    %527 = vmatpush1.xpose.msra.mxu0 0.0
    %528 = vmatprep.subr.mxu0 0.0
    %529 = vmatpush1.xpose.msra.mxu0 0.0
    %530 = vmatprep.subr.mxu0 0.0
    %531 = vmatpush1.xpose.msra.mxu0 0.0
    %532 = vmatprep.subr.mxu0 0.0
    %533 = vmatpush1.xpose.msra.mxu0 0.0
    %534 = vmatprep.mubr.f32.mxu0 0.0
    %v535 = vand.u32 %v60, 4294901760
    %536 = vmatmul.mubr.f32.gmra.mrb[0].mxu0 %v535
    %v537 = vpop.f32.mrb[0].mxu0
    %v538 = vadd.f32 %v440, %v537
    %v539 = vpop.f32.mrb[0].mxu0
    %540 = vmatprep.mubr.f32.mxu0 0.0
    %v541 = vand.u32 %v63, 4294901760
    %542 = vmatmul.mubr.f32.gmra.mrb[0].mxu0 %v541
    %v543 = vpop.f32.mrb[0].mxu0
    %v544 = vadd.f32 %v448, %v543
    %v545 = vpop.f32.mrb[0].mxu0
    %546 = vmatprep.mubr.f32.mxu0 0.0
    %v547 = vand.u32 %v66, 4294901760
    %548 = vmatmul.mubr.f32.gmra.mrb[0].mxu0 %v547
    %v549 = vpop.f32.mrb[0].mxu0
    %v550 = vadd.f32 %v456, %v549
    %v551 = vpop.f32.mrb[0].mxu0
    %552 = vmatprep.mubr.f32.mxu0 0.0
    %v553 = vand.u32 %v69, 4294901760
    %554 = vmatmul.mubr.f32.gmra.mrb[0].mxu0 %v553
    %v555 = vpop.f32.mrb[0].mxu0
    %v556 = vadd.f32 %v464, %v555
    %v557 = vpop.f32.mrb[0].mxu0
    %558 = vdwg.mxu0
    %559 = vmatprep.subr.mxu0 0.0
    %v560 = vand.u32 %v72, 4294901760
    %561 = vmatpush1.xpose.msra.mxu0 %v560
    %562 = vmatprep.subr.mxu0 0.0
    %563 = vmatpush1.xpose.msra.mxu0 0.0
    %564 = vmatprep.subr.mxu0 0.0
    %565 = vmatpush1.xpose.msra.mxu0 0.0
    %566 = vmatprep.subr.mxu0 0.0
    %567 = vmatpush1.xpose.msra.mxu0 0.0
    %568 = vmatprep.subr.mxu0 0.0
    %569 = vmatpush1.xpose.msra.mxu0 0.0
    %570 = vmatprep.subr.mxu0 0.0
    %571 = vmatpush1.xpose.msra.mxu0 0.0
    %572 = vmatprep.subr.mxu0 0.0
    %573 = vmatpush1.xpose.msra.mxu0 0.0
    %574 = vmatprep.subr.mxu0 0.0
    %575 = vmatpush1.xpose.msra.mxu0 0.0
    %576 = vmatprep.subr.mxu0 0.0
    %577 = vmatpush1.xpose.msra.mxu0 0.0
    %578 = vmatprep.subr.mxu0 0.0
    %579 = vmatpush1.xpose.msra.mxu0 0.0
    %580 = vmatprep.subr.mxu0 0.0
    %581 = vmatpush1.xpose.msra.mxu0 0.0
    %582 = vmatprep.subr.mxu0 0.0
    %583 = vmatpush1.xpose.msra.mxu0 0.0
    %584 = vmatprep.subr.mxu0 0.0
    %585 = vmatpush1.xpose.msra.mxu0 0.0
    %586 = vmatprep.subr.mxu0 0.0
    %587 = vmatpush1.xpose.msra.mxu0 0.0
    %588 = vmatprep.subr.mxu0 0.0
    %589 = vmatpush1.xpose.msra.mxu0 0.0
    %590 = vmatprep.subr.mxu0 0.0
    %591 = vmatpush1.xpose.msra.mxu0 0.0
    %592 = vmatprep.subr.mxu0 0.0
    %593 = vmatpush1.xpose.msra.mxu0 0.0
    %594 = vmatprep.subr.mxu0 0.0
    %595 = vmatpush1.xpose.msra.mxu0 0.0
    %596 = vmatprep.subr.mxu0 0.0
    %597 = vmatpush1.xpose.msra.mxu0 0.0
    %598 = vmatprep.subr.mxu0 0.0
    %599 = vmatpush1.xpose.msra.mxu0 0.0
    %600 = vmatprep.subr.mxu0 0.0
    %601 = vmatpush1.xpose.msra.mxu0 0.0
    %602 = vmatprep.subr.mxu0 0.0
    %603 = vmatpush1.xpose.msra.mxu0 0.0
    %604 = vmatprep.subr.mxu0 0.0
    %605 = vmatpush1.xpose.msra.mxu0 0.0
    %606 = vmatprep.subr.mxu0 0.0
    %607 = vmatpush1.xpose.msra.mxu0 0.0
    %608 = vmatprep.subr.mxu0 0.0
    %609 = vmatpush1.xpose.msra.mxu0 0.0
    %610 = vmatprep.subr.mxu0 0.0
    %611 = vmatpush1.xpose.msra.mxu0 0.0
    %612 = vmatprep.subr.mxu0 0.0
    %613 = vmatpush1.xpose.msra.mxu0 0.0
    %614 = vmatprep.subr.mxu0 0.0
    %615 = vmatpush1.xpose.msra.mxu0 0.0
    %616 = vmatprep.subr.mxu0 0.0
    %617 = vmatpush1.xpose.msra.mxu0 0.0
    %618 = vmatprep.subr.mxu0 0.0
    %619 = vmatpush1.xpose.msra.mxu0 0.0
    %620 = vmatprep.subr.mxu0 0.0
    %621 = vmatpush1.xpose.msra.mxu0 0.0
    %622 = vmatprep.subr.mxu0 0.0
    %623 = vmatpush1.xpose.msra.mxu0 0.0
    %624 = vmatprep.mubr.f32.mxu0 0.0
    %v625 = vand.u32 %v60, 4294901760
    %626 = vmatmul.mubr.f32.gmra.mrb[0].mxu0 %v625
    %v627 = vpop.f32.mrb[0].mxu0
    %v628 = vadd.f32 %v538, %v627
    %v629 = vpop.f32.mrb[0].mxu0
    %630 = vmatprep.mubr.f32.mxu0 0.0
    %v631 = vand.u32 %v63, 4294901760
    %632 = vmatmul.mubr.f32.gmra.mrb[0].mxu0 %v631
    %v633 = vpop.f32.mrb[0].mxu0
    %v634 = vadd.f32 %v544, %v633
    %v635 = vpop.f32.mrb[0].mxu0
    %636 = vmatprep.mubr.f32.mxu0 0.0
    %v637 = vand.u32 %v66, 4294901760
    %638 = vmatmul.mubr.f32.gmra.mrb[0].mxu0 %v637
    %v639 = vpop.f32.mrb[0].mxu0
    %v640 = vadd.f32 %v550, %v639
    %v641 = vpop.f32.mrb[0].mxu0
    %642 = vmatprep.mubr.f32.mxu0 0.0
    %v643 = vand.u32 %v69, 4294901760
    %644 = vmatmul.mubr.f32.gmra.mrb[0].mxu0 %v643
    %v645 = vpop.f32.mrb[0].mxu0
    %v646 = vadd.f32 %v556, %v645
    %v647 = vpop.f32.mrb[0].mxu0
    %648 = vdwg.mxu0
    %v649 = vmax.f32 %v628, 0.0
    %v650 = vmax.f32 %v634, 0.0
    %v651 = vmax.f32 %v640, 0.0
    %v652 = vmax.f32 %v646, 0.0
    %v653 = vld [vmem:[%s3] sm:$0xff]
    %v654 = vld [vmem:[%s3 + $0x8] sm:$0xff]
    %v655 = vld [vmem:[%s3 + $0x10] sm:$0xff]
    %v656 = vld [vmem:[%s3 + $0x18] sm:$0xff]
    %v657 = vld [vmem:[%s4] sm:$0xff]
    %v658 = vld [vmem:[%s4 + $0x8] sm:$0xff]
    %v659 = vld [vmem:[%s4 + $0x10] sm:$0xff]
    %v660 = vld [vmem:[%s4 + $0x18] sm:$0xff]
    %662 = vset.pattern.permute.xlu0 0
    %663 = vperm.xlu0 %662, %v657
    %v664 = vpop.permute.xlu0 %663
    %667 = vset.pattern.permute.xlu0 0
    %668 = vperm.xlu0 %667, %v658
    %v669 = vpop.permute.xlu0 %668
    %672 = vset.pattern.permute.xlu0 0
    %673 = vperm.xlu0 %672, %v659
    %v674 = vpop.permute.xlu0 %673
    %677 = vset.pattern.permute.xlu0 0
    %678 = vperm.xlu0 %677, %v660
    %v679 = vpop.permute.xlu0 %678
    %v682 = vsel %vm58, %v653, 0
    %v685 = vsel %vm58, %v654, 0
    %v688 = vsel %vm58, %v655, 0
    %v691 = vsel %vm58, %v656, 0
    %693 = vmatprep.subr.mxu0 0.0
    %v694 = vand.u32 %v649, 4294901760
    %695 = vmatpush1.msra.mxu0 %v694
    %696 = vmatprep.subr.mxu0 0.0
    %v697 = vand.u32 %v650, 4294901760
    %698 = vmatpush1.msra.mxu0 %v697
    %699 = vmatprep.subr.mxu0 0.0
    %v700 = vand.u32 %v651, 4294901760
    %701 = vmatpush1.msra.mxu0 %v700
    %702 = vmatprep.subr.mxu0 0.0
    %v703 = vand.u32 %v652, 4294901760
    %704 = vmatpush1.msra.mxu0 %v703
    %705 = vmatprep.subr.mxu0 0.0
    %706 = vmatpush1.msra.mxu0 0.0
    %707 = vmatprep.subr.mxu0 0.0
    %708 = vmatpush1.msra.mxu0 0.0
    %709 = vmatprep.subr.mxu0 0.0
    %710 = vmatpush1.msra.mxu0 0.0
    %711 = vmatprep.subr.mxu0 0.0
    %712 = vmatpush1.msra.mxu0 0.0
    %713 = vmatprep.subr.mxu0 0.0
    %714 = vmatpush1.msra.mxu0 0.0
    %715 = vmatprep.subr.mxu0 0.0
    %716 = vmatpush1.msra.mxu0 0.0
    %717 = vmatprep.subr.mxu0 0.0
    %718 = vmatpush1.msra.mxu0 0.0
    %719 = vmatprep.subr.mxu0 0.0
    %720 = vmatpush1.msra.mxu0 0.0
    %721 = vmatprep.subr.mxu0 0.0
    %722 = vmatpush1.msra.mxu0 0.0
    %723 = vmatprep.subr.mxu0 0.0
    %724 = vmatpush1.msra.mxu0 0.0
    %725 = vmatprep.subr.mxu0 0.0
    %726 = vmatpush1.msra.mxu0 0.0
    %727 = vmatprep.subr.mxu0 0.0
    %728 = vmatpush1.msra.mxu0 0.0
    %729 = vmatprep.subr.mxu0 0.0
    %730 = vmatpush1.msra.mxu0 0.0
    %731 = vmatprep.subr.mxu0 0.0
    %732 = vmatpush1.msra.mxu0 0.0
    %733 = vmatprep.subr.mxu0 0.0
    %734 = vmatpush1.msra.mxu0 0.0
    %735 = vmatprep.subr.mxu0 0.0
    %736 = vmatpush1.msra.mxu0 0.0
    %737 = vmatprep.subr.mxu0 0.0
    %738 = vmatpush1.msra.mxu0 0.0
    %739 = vmatprep.subr.mxu0 0.0
    %740 = vmatpush1.msra.mxu0 0.0
    %741 = vmatprep.subr.mxu0 0.0
    %742 = vmatpush1.msra.mxu0 0.0
    %743 = vmatprep.subr.mxu0 0.0
    %744 = vmatpush1.msra.mxu0 0.0
    %745 = vmatprep.subr.mxu0 0.0
    %746 = vmatpush1.msra.mxu0 0.0
    %747 = vmatprep.subr.mxu0 0.0
    %748 = vmatpush1.msra.mxu0 0.0
    %749 = vmatprep.subr.mxu0 0.0
    %750 = vmatpush1.msra.mxu0 0.0
    %751 = vmatprep.subr.mxu0 0.0
    %752 = vmatpush1.msra.mxu0 0.0
    %753 = vmatprep.subr.mxu0 0.0
    %754 = vmatpush1.msra.mxu0 0.0
    %755 = vmatprep.subr.mxu0 0.0
    %756 = vmatpush1.msra.mxu0 0.0
    %757 = vmatprep.subr.mxu0 0.0
    %758 = vmatpush1.msra.mxu0 0.0
    %759 = vmatprep.subr.mxu0 0.0
    %760 = vmatpush1.msra.mxu0 0.0
    %761 = vmatprep.mubr.f32.mxu0 0.0
    %v762 = vand.u32 %v682, 4294901760
    %v763 = vsub.f32 %v682, %v762
    %v764 = vand.u32 %v763, 4294901760
    %v765 = vsub.f32 %v763, %v764
    %v766 = vand.u32 %v765, 4294901760
    %767 = vmatmul.mubr.f32.gmra.mrb[0].mxu0 %v766
    %v768 = vpop.f32.mrb[0].mxu0
    %v769 = vadd.f32 %v664, %v768
    %v770 = vpop.f32.mrb[0].mxu0
    %771 = vmatprep.mubr.f32.mxu0 0.0
    %v772 = vand.u32 %v685, 4294901760
    %v773 = vsub.f32 %v685, %v772
    %v774 = vand.u32 %v773, 4294901760
    %v775 = vsub.f32 %v773, %v774
    %v776 = vand.u32 %v775, 4294901760
    %777 = vmatmul.mubr.f32.gmra.mrb[0].mxu0 %v776
    %v778 = vpop.f32.mrb[0].mxu0
    %v779 = vadd.f32 %v669, %v778
    %v780 = vpop.f32.mrb[0].mxu0
    %781 = vmatprep.mubr.f32.mxu0 0.0
    %v782 = vand.u32 %v688, 4294901760
    %v783 = vsub.f32 %v688, %v782
    %v784 = vand.u32 %v783, 4294901760
    %v785 = vsub.f32 %v783, %v784
    %v786 = vand.u32 %v785, 4294901760
    %787 = vmatmul.mubr.f32.gmra.mrb[0].mxu0 %v786
    %v788 = vpop.f32.mrb[0].mxu0
    %v789 = vadd.f32 %v674, %v788
    %v790 = vpop.f32.mrb[0].mxu0
    %791 = vmatprep.mubr.f32.mxu0 0.0
    %v792 = vand.u32 %v691, 4294901760
    %v793 = vsub.f32 %v691, %v792
    %v794 = vand.u32 %v793, 4294901760
    %v795 = vsub.f32 %v793, %v794
    %v796 = vand.u32 %v795, 4294901760
    %797 = vmatmul.mubr.f32.gmra.mrb[0].mxu0 %v796
    %v798 = vpop.f32.mrb[0].mxu0
    %v799 = vadd.f32 %v679, %v798
    %v800 = vpop.f32.mrb[0].mxu0
    %801 = vdwg.mxu0
    %802 = vmatprep.subr.mxu0 0.0
    %v803 = vand.u32 %v649, 4294901760
    %v804 = vsub.f32 %v649, %v803
    %v805 = vand.u32 %v804, 4294901760
    %v806 = vsub.f32 %v804, %v805
    %v807 = vand.u32 %v806, 4294901760
    %808 = vmatpush1.msra.mxu0 %v807
    %809 = vmatprep.subr.mxu0 0.0
    %v810 = vand.u32 %v650, 4294901760
    %v811 = vsub.f32 %v650, %v810
    %v812 = vand.u32 %v811, 4294901760
    %v813 = vsub.f32 %v811, %v812
    %v814 = vand.u32 %v813, 4294901760
    %815 = vmatpush1.msra.mxu0 %v814
    %816 = vmatprep.subr.mxu0 0.0
    %v817 = vand.u32 %v651, 4294901760
    %v818 = vsub.f32 %v651, %v817
    %v819 = vand.u32 %v818, 4294901760
    %v820 = vsub.f32 %v818, %v819
    %v821 = vand.u32 %v820, 4294901760
    %822 = vmatpush1.msra.mxu0 %v821
    %823 = vmatprep.subr.mxu0 0.0
    %v824 = vand.u32 %v652, 4294901760
    %v825 = vsub.f32 %v652, %v824
    %v826 = vand.u32 %v825, 4294901760
    %v827 = vsub.f32 %v825, %v826
    %v828 = vand.u32 %v827, 4294901760
    %829 = vmatpush1.msra.mxu0 %v828
    %830 = vmatprep.subr.mxu0 0.0
    %831 = vmatpush1.msra.mxu0 0.0
    %832 = vmatprep.subr.mxu0 0.0
    %833 = vmatpush1.msra.mxu0 0.0
    %834 = vmatprep.subr.mxu0 0.0
    %835 = vmatpush1.msra.mxu0 0.0
    %836 = vmatprep.subr.mxu0 0.0
    %837 = vmatpush1.msra.mxu0 0.0
    %838 = vmatprep.subr.mxu0 0.0
    %839 = vmatpush1.msra.mxu0 0.0
    %840 = vmatprep.subr.mxu0 0.0
    %841 = vmatpush1.msra.mxu0 0.0
    %842 = vmatprep.subr.mxu0 0.0
    %843 = vmatpush1.msra.mxu0 0.0
    %844 = vmatprep.subr.mxu0 0.0
    %845 = vmatpush1.msra.mxu0 0.0
    %846 = vmatprep.subr.mxu0 0.0
    %847 = vmatpush1.msra.mxu0 0.0
    %848 = vmatprep.subr.mxu0 0.0
    %849 = vmatpush1.msra.mxu0 0.0
    %850 = vmatprep.subr.mxu0 0.0
    %851 = vmatpush1.msra.mxu0 0.0
    %852 = vmatprep.subr.mxu0 0.0
    %853 = vmatpush1.msra.mxu0 0.0
    %854 = vmatprep.subr.mxu0 0.0
    %855 = vmatpush1.msra.mxu0 0.0
    %856 = vmatprep.subr.mxu0 0.0
    %857 = vmatpush1.msra.mxu0 0.0
    %858 = vmatprep.subr.mxu0 0.0
    %859 = vmatpush1.msra.mxu0 0.0
    %860 = vmatprep.subr.mxu0 0.0
    %861 = vmatpush1.msra.mxu0 0.0
    %862 = vmatprep.subr.mxu0 0.0
    %863 = vmatpush1.msra.mxu0 0.0
    %864 = vmatprep.subr.mxu0 0.0
    %865 = vmatpush1.msra.mxu0 0.0
    %866 = vmatprep.subr.mxu0 0.0
    %867 = vmatpush1.msra.mxu0 0.0
    %868 = vmatprep.subr.mxu0 0.0
    %869 = vmatpush1.msra.mxu0 0.0
    %870 = vmatprep.subr.mxu0 0.0
    %871 = vmatpush1.msra.mxu0 0.0
    %872 = vmatprep.subr.mxu0 0.0
    %873 = vmatpush1.msra.mxu0 0.0
    %874 = vmatprep.subr.mxu0 0.0
    %875 = vmatpush1.msra.mxu0 0.0
    %876 = vmatprep.subr.mxu0 0.0
    %877 = vmatpush1.msra.mxu0 0.0
    %878 = vmatprep.subr.mxu0 0.0
    %879 = vmatpush1.msra.mxu0 0.0
    %880 = vmatprep.subr.mxu0 0.0
    %881 = vmatpush1.msra.mxu0 0.0
    %882 = vmatprep.subr.mxu0 0.0
    %883 = vmatpush1.msra.mxu0 0.0
    %884 = vmatprep.subr.mxu0 0.0
    %885 = vmatpush1.msra.mxu0 0.0
    %886 = vmatprep.mubr.f32.mxu0 0.0
    %v887 = vand.u32 %v682, 4294901760
    %888 = vmatmul.mubr.f32.gmra.mrb[0].mxu0 %v887
    %v889 = vpop.f32.mrb[0].mxu0
    %v890 = vadd.f32 %v769, %v889
    %v891 = vpop.f32.mrb[0].mxu0
    %892 = vmatprep.mubr.f32.mxu0 0.0
    %v893 = vand.u32 %v685, 4294901760
    %894 = vmatmul.mubr.f32.gmra.mrb[0].mxu0 %v893
    %v895 = vpop.f32.mrb[0].mxu0
    %v896 = vadd.f32 %v779, %v895
    %v897 = vpop.f32.mrb[0].mxu0
    %898 = vmatprep.mubr.f32.mxu0 0.0
    %v899 = vand.u32 %v688, 4294901760
    %900 = vmatmul.mubr.f32.gmra.mrb[0].mxu0 %v899
    %v901 = vpop.f32.mrb[0].mxu0
    %v902 = vadd.f32 %v789, %v901
    %v903 = vpop.f32.mrb[0].mxu0
    %904 = vmatprep.mubr.f32.mxu0 0.0
    %v905 = vand.u32 %v691, 4294901760
    %906 = vmatmul.mubr.f32.gmra.mrb[0].mxu0 %v905
    %v907 = vpop.f32.mrb[0].mxu0
    %v908 = vadd.f32 %v799, %v907
    %v909 = vpop.f32.mrb[0].mxu0
    %910 = vdwg.mxu0
    %911 = vmatprep.subr.mxu0 0.0
    %v912 = vand.u32 %v649, 4294901760
    %v913 = vsub.f32 %v649, %v912
    %914 = vmatpush1.msra.mxu0 %v913
    %915 = vmatprep.subr.mxu0 0.0
    %v916 = vand.u32 %v650, 4294901760
    %v917 = vsub.f32 %v650, %v916
    %918 = vmatpush1.msra.mxu0 %v917
    %919 = vmatprep.subr.mxu0 0.0
    %v920 = vand.u32 %v651, 4294901760
    %v921 = vsub.f32 %v651, %v920
    %922 = vmatpush1.msra.mxu0 %v921
    %923 = vmatprep.subr.mxu0 0.0
    %v924 = vand.u32 %v652, 4294901760
    %v925 = vsub.f32 %v652, %v924
    %926 = vmatpush1.msra.mxu0 %v925
    %927 = vmatprep.subr.mxu0 0.0
    %928 = vmatpush1.msra.mxu0 0.0
    %929 = vmatprep.subr.mxu0 0.0
    %930 = vmatpush1.msra.mxu0 0.0
    %931 = vmatprep.subr.mxu0 0.0
    %932 = vmatpush1.msra.mxu0 0.0
    %933 = vmatprep.subr.mxu0 0.0
    %934 = vmatpush1.msra.mxu0 0.0
    %935 = vmatprep.subr.mxu0 0.0
    %936 = vmatpush1.msra.mxu0 0.0
    %937 = vmatprep.subr.mxu0 0.0
    %938 = vmatpush1.msra.mxu0 0.0
    %939 = vmatprep.subr.mxu0 0.0
    %940 = vmatpush1.msra.mxu0 0.0
    %941 = vmatprep.subr.mxu0 0.0
    %942 = vmatpush1.msra.mxu0 0.0
    %943 = vmatprep.subr.mxu0 0.0
    %944 = vmatpush1.msra.mxu0 0.0
    %945 = vmatprep.subr.mxu0 0.0
    %946 = vmatpush1.msra.mxu0 0.0
    %947 = vmatprep.subr.mxu0 0.0
    %948 = vmatpush1.msra.mxu0 0.0
    %949 = vmatprep.subr.mxu0 0.0
    %950 = vmatpush1.msra.mxu0 0.0
    %951 = vmatprep.subr.mxu0 0.0
    %952 = vmatpush1.msra.mxu0 0.0
    %953 = vmatprep.subr.mxu0 0.0
    %954 = vmatpush1.msra.mxu0 0.0
    %955 = vmatprep.subr.mxu0 0.0
    %956 = vmatpush1.msra.mxu0 0.0
    %957 = vmatprep.subr.mxu0 0.0
    %958 = vmatpush1.msra.mxu0 0.0
    %959 = vmatprep.subr.mxu0 0.0
    %960 = vmatpush1.msra.mxu0 0.0
    %961 = vmatprep.subr.mxu0 0.0
    %962 = vmatpush1.msra.mxu0 0.0
    %963 = vmatprep.subr.mxu0 0.0
    %964 = vmatpush1.msra.mxu0 0.0
    %965 = vmatprep.subr.mxu0 0.0
    %966 = vmatpush1.msra.mxu0 0.0
    %967 = vmatprep.subr.mxu0 0.0
    %968 = vmatpush1.msra.mxu0 0.0
    %969 = vmatprep.subr.mxu0 0.0
    %970 = vmatpush1.msra.mxu0 0.0
    %971 = vmatprep.subr.mxu0 0.0
    %972 = vmatpush1.msra.mxu0 0.0
    %973 = vmatprep.subr.mxu0 0.0
    %974 = vmatpush1.msra.mxu0 0.0
    %975 = vmatprep.subr.mxu0 0.0
    %976 = vmatpush1.msra.mxu0 0.0
    %977 = vmatprep.subr.mxu0 0.0
    %978 = vmatpush1.msra.mxu0 0.0
    %979 = vmatprep.subr.mxu0 0.0
    %980 = vmatpush1.msra.mxu0 0.0
    %981 = vmatprep.subr.mxu0 0.0
    %982 = vmatpush1.msra.mxu0 0.0
    %983 = vmatprep.mubr.f32.mxu0 0.0
    %v984 = vand.u32 %v682, 4294901760
    %v985 = vsub.f32 %v682, %v984
    %986 = vmatmul.mubr.f32.gmra.mrb[0].mxu0 %v985
    %v987 = vpop.f32.mrb[0].mxu0
    %v988 = vadd.f32 %v890, %v987
    %v989 = vpop.f32.mrb[0].mxu0
    %990 = vmatprep.mubr.f32.mxu0 0.0
    %v991 = vand.u32 %v685, 4294901760
    %v992 = vsub.f32 %v685, %v991
    %993 = vmatmul.mubr.f32.gmra.mrb[0].mxu0 %v992
    %v994 = vpop.f32.mrb[0].mxu0
    %v995 = vadd.f32 %v896, %v994
    %v996 = vpop.f32.mrb[0].mxu0
    %997 = vmatprep.mubr.f32.mxu0 0.0
    %v998 = vand.u32 %v688, 4294901760
    %v999 = vsub.f32 %v688, %v998
    %1000 = vmatmul.mubr.f32.gmra.mrb[0].mxu0 %v999
    %v1001 = vpop.f32.mrb[0].mxu0
    %v1002 = vadd.f32 %v902, %v1001
    %v1003 = vpop.f32.mrb[0].mxu0
    %1004 = vmatprep.mubr.f32.mxu0 0.0
    %v1005 = vand.u32 %v691, 4294901760
    %v1006 = vsub.f32 %v691, %v1005
    %1007 = vmatmul.mubr.f32.gmra.mrb[0].mxu0 %v1006
    %v1008 = vpop.f32.mrb[0].mxu0
    %v1009 = vadd.f32 %v908, %v1008
    %v1010 = vpop.f32.mrb[0].mxu0
    %1011 = vdwg.mxu0
    %1012 = vmatprep.subr.mxu0 0.0
    %v1013 = vand.u32 %v649, 4294901760
    %1014 = vmatpush1.msra.mxu0 %v1013
    %1015 = vmatprep.subr.mxu0 0.0
    %v1016 = vand.u32 %v650, 4294901760
    %1017 = vmatpush1.msra.mxu0 %v1016
    %1018 = vmatprep.subr.mxu0 0.0
    %v1019 = vand.u32 %v651, 4294901760
    %1020 = vmatpush1.msra.mxu0 %v1019
    %1021 = vmatprep.subr.mxu0 0.0
    %v1022 = vand.u32 %v652, 4294901760
    %1023 = vmatpush1.msra.mxu0 %v1022
    %1024 = vmatprep.subr.mxu0 0.0
    %1025 = vmatpush1.msra.mxu0 0.0
    %1026 = vmatprep.subr.mxu0 0.0
    %1027 = vmatpush1.msra.mxu0 0.0
    %1028 = vmatprep.subr.mxu0 0.0
    %1029 = vmatpush1.msra.mxu0 0.0
    %1030 = vmatprep.subr.mxu0 0.0
    %1031 = vmatpush1.msra.mxu0 0.0
    %1032 = vmatprep.subr.mxu0 0.0
    %1033 = vmatpush1.msra.mxu0 0.0
    %1034 = vmatprep.subr.mxu0 0.0
    %1035 = vmatpush1.msra.mxu0 0.0
    %1036 = vmatprep.subr.mxu0 0.0
    %1037 = vmatpush1.msra.mxu0 0.0
    %1038 = vmatprep.subr.mxu0 0.0
    %1039 = vmatpush1.msra.mxu0 0.0
    %1040 = vmatprep.subr.mxu0 0.0
    %1041 = vmatpush1.msra.mxu0 0.0
    %1042 = vmatprep.subr.mxu0 0.0
    %1043 = vmatpush1.msra.mxu0 0.0
    %1044 = vmatprep.subr.mxu0 0.0
    %1045 = vmatpush1.msra.mxu0 0.0
    %1046 = vmatprep.subr.mxu0 0.0
    %1047 = vmatpush1.msra.mxu0 0.0
    %1048 = vmatprep.subr.mxu0 0.0
    %1049 = vmatpush1.msra.mxu0 0.0
    %1050 = vmatprep.subr.mxu0 0.0
    %1051 = vmatpush1.msra.mxu0 0.0
    %1052 = vmatprep.subr.mxu0 0.0
    %1053 = vmatpush1.msra.mxu0 0.0
    %1054 = vmatprep.subr.mxu0 0.0
    %1055 = vmatpush1.msra.mxu0 0.0
    %1056 = vmatprep.subr.mxu0 0.0
    %1057 = vmatpush1.msra.mxu0 0.0
    %1058 = vmatprep.subr.mxu0 0.0
    %1059 = vmatpush1.msra.mxu0 0.0
    %1060 = vmatprep.subr.mxu0 0.0
    %1061 = vmatpush1.msra.mxu0 0.0
    %1062 = vmatprep.subr.mxu0 0.0
    %1063 = vmatpush1.msra.mxu0 0.0
    %1064 = vmatprep.subr.mxu0 0.0
    %1065 = vmatpush1.msra.mxu0 0.0
    %1066 = vmatprep.subr.mxu0 0.0
    %1067 = vmatpush1.msra.mxu0 0.0
    %1068 = vmatprep.subr.mxu0 0.0
    %1069 = vmatpush1.msra.mxu0 0.0
    %1070 = vmatprep.subr.mxu0 0.0
    %1071 = vmatpush1.msra.mxu0 0.0
    %1072 = vmatprep.subr.mxu0 0.0
    %1073 = vmatpush1.msra.mxu0 0.0
    %1074 = vmatprep.subr.mxu0 0.0
    %1075 = vmatpush1.msra.mxu0 0.0
    %1076 = vmatprep.subr.mxu0 0.0
    %1077 = vmatpush1.msra.mxu0 0.0
    %1078 = vmatprep.subr.mxu0 0.0
    %1079 = vmatpush1.msra.mxu0 0.0
    %1080 = vmatprep.mubr.f32.mxu0 0.0
    %v1081 = vand.u32 %v682, 4294901760
    %v1082 = vsub.f32 %v682, %v1081
    %v1083 = vand.u32 %v1082, 4294901760
    %1084 = vmatmul.mubr.f32.gmra.mrb[0].mxu0 %v1083
    %v1085 = vpop.f32.mrb[0].mxu0
    %v1086 = vadd.f32 %v988, %v1085
    %v1087 = vpop.f32.mrb[0].mxu0
    %1088 = vmatprep.mubr.f32.mxu0 0.0
    %v1089 = vand.u32 %v685, 4294901760
    %v1090 = vsub.f32 %v685, %v1089
    %v1091 = vand.u32 %v1090, 4294901760
    %1092 = vmatmul.mubr.f32.gmra.mrb[0].mxu0 %v1091
    %v1093 = vpop.f32.mrb[0].mxu0
    %v1094 = vadd.f32 %v995, %v1093
    %v1095 = vpop.f32.mrb[0].mxu0
    %1096 = vmatprep.mubr.f32.mxu0 0.0
    %v1097 = vand.u32 %v688, 4294901760
    %v1098 = vsub.f32 %v688, %v1097
    %v1099 = vand.u32 %v1098, 4294901760
    %1100 = vmatmul.mubr.f32.gmra.mrb[0].mxu0 %v1099
    %v1101 = vpop.f32.mrb[0].mxu0
    %v1102 = vadd.f32 %v1002, %v1101
    %v1103 = vpop.f32.mrb[0].mxu0
    %1104 = vmatprep.mubr.f32.mxu0 0.0
    %v1105 = vand.u32 %v691, 4294901760
    %v1106 = vsub.f32 %v691, %v1105
    %v1107 = vand.u32 %v1106, 4294901760
    %1108 = vmatmul.mubr.f32.gmra.mrb[0].mxu0 %v1107
    %v1109 = vpop.f32.mrb[0].mxu0
    %v1110 = vadd.f32 %v1009, %v1109
    %v1111 = vpop.f32.mrb[0].mxu0
    %1112 = vdwg.mxu0
    %1113 = vmatprep.subr.mxu0 0.0
    %v1114 = vand.u32 %v649, 4294901760
    %v1115 = vsub.f32 %v649, %v1114
    %v1116 = vand.u32 %v1115, 4294901760
    %1117 = vmatpush1.msra.mxu0 %v1116
    %1118 = vmatprep.subr.mxu0 0.0
    %v1119 = vand.u32 %v650, 4294901760
    %v1120 = vsub.f32 %v650, %v1119
    %v1121 = vand.u32 %v1120, 4294901760
    %1122 = vmatpush1.msra.mxu0 %v1121
    %1123 = vmatprep.subr.mxu0 0.0
    %v1124 = vand.u32 %v651, 4294901760
    %v1125 = vsub.f32 %v651, %v1124
    %v1126 = vand.u32 %v1125, 4294901760
    %1127 = vmatpush1.msra.mxu0 %v1126
    %1128 = vmatprep.subr.mxu0 0.0
    %v1129 = vand.u32 %v652, 4294901760
    %v1130 = vsub.f32 %v652, %v1129
    %v1131 = vand.u32 %v1130, 4294901760
    %1132 = vmatpush1.msra.mxu0 %v1131
    %1133 = vmatprep.subr.mxu0 0.0
    %1134 = vmatpush1.msra.mxu0 0.0
    %1135 = vmatprep.subr.mxu0 0.0
    %1136 = vmatpush1.msra.mxu0 0.0
    %1137 = vmatprep.subr.mxu0 0.0
    %1138 = vmatpush1.msra.mxu0 0.0
    %1139 = vmatprep.subr.mxu0 0.0
    %1140 = vmatpush1.msra.mxu0 0.0
    %1141 = vmatprep.subr.mxu0 0.0
    %1142 = vmatpush1.msra.mxu0 0.0
    %1143 = vmatprep.subr.mxu0 0.0
    %1144 = vmatpush1.msra.mxu0 0.0
    %1145 = vmatprep.subr.mxu0 0.0
    %1146 = vmatpush1.msra.mxu0 0.0
    %1147 = vmatprep.subr.mxu0 0.0
    %1148 = vmatpush1.msra.mxu0 0.0
    %1149 = vmatprep.subr.mxu0 0.0
    %1150 = vmatpush1.msra.mxu0 0.0
    %1151 = vmatprep.subr.mxu0 0.0
    %1152 = vmatpush1.msra.mxu0 0.0
    %1153 = vmatprep.subr.mxu0 0.0
    %1154 = vmatpush1.msra.mxu0 0.0
    %1155 = vmatprep.subr.mxu0 0.0
    %1156 = vmatpush1.msra.mxu0 0.0
    %1157 = vmatprep.subr.mxu0 0.0
    %1158 = vmatpush1.msra.mxu0 0.0
    %1159 = vmatprep.subr.mxu0 0.0
    %1160 = vmatpush1.msra.mxu0 0.0
    %1161 = vmatprep.subr.mxu0 0.0
    %1162 = vmatpush1.msra.mxu0 0.0
    %1163 = vmatprep.subr.mxu0 0.0
    %1164 = vmatpush1.msra.mxu0 0.0
    %1165 = vmatprep.subr.mxu0 0.0
    %1166 = vmatpush1.msra.mxu0 0.0
    %1167 = vmatprep.subr.mxu0 0.0
    %1168 = vmatpush1.msra.mxu0 0.0
    %1169 = vmatprep.subr.mxu0 0.0
    %1170 = vmatpush1.msra.mxu0 0.0
    %1171 = vmatprep.subr.mxu0 0.0
    %1172 = vmatpush1.msra.mxu0 0.0
    %1173 = vmatprep.subr.mxu0 0.0
    %1174 = vmatpush1.msra.mxu0 0.0
    %1175 = vmatprep.subr.mxu0 0.0
    %1176 = vmatpush1.msra.mxu0 0.0
    %1177 = vmatprep.subr.mxu0 0.0
    %1178 = vmatpush1.msra.mxu0 0.0
    %1179 = vmatprep.subr.mxu0 0.0
    %1180 = vmatpush1.msra.mxu0 0.0
    %1181 = vmatprep.subr.mxu0 0.0
    %1182 = vmatpush1.msra.mxu0 0.0
    %1183 = vmatprep.subr.mxu0 0.0
    %1184 = vmatpush1.msra.mxu0 0.0
    %1185 = vmatprep.subr.mxu0 0.0
    %1186 = vmatpush1.msra.mxu0 0.0
    %1187 = vmatprep.subr.mxu0 0.0
    %1188 = vmatpush1.msra.mxu0 0.0
    %1189 = vmatprep.mubr.f32.mxu0 0.0
    %v1190 = vand.u32 %v682, 4294901760
    %1191 = vmatmul.mubr.f32.gmra.mrb[0].mxu0 %v1190
    %v1192 = vpop.f32.mrb[0].mxu0
    %v1193 = vadd.f32 %v1086, %v1192
    %v1194 = vpop.f32.mrb[0].mxu0
    %1195 = vmatprep.mubr.f32.mxu0 0.0
    %v1196 = vand.u32 %v685, 4294901760
    %1197 = vmatmul.mubr.f32.gmra.mrb[0].mxu0 %v1196
    %v1198 = vpop.f32.mrb[0].mxu0
    %v1199 = vadd.f32 %v1094, %v1198
    %v1200 = vpop.f32.mrb[0].mxu0
    %1201 = vmatprep.mubr.f32.mxu0 0.0
    %v1202 = vand.u32 %v688, 4294901760
    %1203 = vmatmul.mubr.f32.gmra.mrb[0].mxu0 %v1202
    %v1204 = vpop.f32.mrb[0].mxu0
    %v1205 = vadd.f32 %v1102, %v1204
    %v1206 = vpop.f32.mrb[0].mxu0
    %1207 = vmatprep.mubr.f32.mxu0 0.0
    %v1208 = vand.u32 %v691, 4294901760
    %1209 = vmatmul.mubr.f32.gmra.mrb[0].mxu0 %v1208
    %v1210 = vpop.f32.mrb[0].mxu0
    %v1211 = vadd.f32 %v1110, %v1210
    %v1212 = vpop.f32.mrb[0].mxu0
    %1213 = vdwg.mxu0
    %1214 = vmatprep.subr.mxu0 0.0
    %v1215 = vand.u32 %v649, 4294901760
    %1216 = vmatpush1.msra.mxu0 %v1215
    %1217 = vmatprep.subr.mxu0 0.0
    %v1218 = vand.u32 %v650, 4294901760
    %1219 = vmatpush1.msra.mxu0 %v1218
    %1220 = vmatprep.subr.mxu0 0.0
    %v1221 = vand.u32 %v651, 4294901760
    %1222 = vmatpush1.msra.mxu0 %v1221
    %1223 = vmatprep.subr.mxu0 0.0
    %v1224 = vand.u32 %v652, 4294901760
    %1225 = vmatpush1.msra.mxu0 %v1224
    %1226 = vmatprep.subr.mxu0 0.0
    %1227 = vmatpush1.msra.mxu0 0.0
    %1228 = vmatprep.subr.mxu0 0.0
    %1229 = vmatpush1.msra.mxu0 0.0
    %1230 = vmatprep.subr.mxu0 0.0
    %1231 = vmatpush1.msra.mxu0 0.0
    %1232 = vmatprep.subr.mxu0 0.0
    %1233 = vmatpush1.msra.mxu0 0.0
    %1234 = vmatprep.subr.mxu0 0.0
    %1235 = vmatpush1.msra.mxu0 0.0
    %1236 = vmatprep.subr.mxu0 0.0
    %1237 = vmatpush1.msra.mxu0 0.0
    %1238 = vmatprep.subr.mxu0 0.0
    %1239 = vmatpush1.msra.mxu0 0.0
    %1240 = vmatprep.subr.mxu0 0.0
    %1241 = vmatpush1.msra.mxu0 0.0
    %1242 = vmatprep.subr.mxu0 0.0
    %1243 = vmatpush1.msra.mxu0 0.0
    %1244 = vmatprep.subr.mxu0 0.0
    %1245 = vmatpush1.msra.mxu0 0.0
    %1246 = vmatprep.subr.mxu0 0.0
    %1247 = vmatpush1.msra.mxu0 0.0
    %1248 = vmatprep.subr.mxu0 0.0
    %1249 = vmatpush1.msra.mxu0 0.0
    %1250 = vmatprep.subr.mxu0 0.0
    %1251 = vmatpush1.msra.mxu0 0.0
    %1252 = vmatprep.subr.mxu0 0.0
    %1253 = vmatpush1.msra.mxu0 0.0
    %1254 = vmatprep.subr.mxu0 0.0
    %1255 = vmatpush1.msra.mxu0 0.0
    %1256 = vmatprep.subr.mxu0 0.0
    %1257 = vmatpush1.msra.mxu0 0.0
    %1258 = vmatprep.subr.mxu0 0.0
    %1259 = vmatpush1.msra.mxu0 0.0
    %1260 = vmatprep.subr.mxu0 0.0
    %1261 = vmatpush1.msra.mxu0 0.0
    %1262 = vmatprep.subr.mxu0 0.0
    %1263 = vmatpush1.msra.mxu0 0.0
    %1264 = vmatprep.subr.mxu0 0.0
    %1265 = vmatpush1.msra.mxu0 0.0
    %1266 = vmatprep.subr.mxu0 0.0
    %1267 = vmatpush1.msra.mxu0 0.0
    %1268 = vmatprep.subr.mxu0 0.0
    %1269 = vmatpush1.msra.mxu0 0.0
    %1270 = vmatprep.subr.mxu0 0.0
    %1271 = vmatpush1.msra.mxu0 0.0
    %1272 = vmatprep.subr.mxu0 0.0
    %1273 = vmatpush1.msra.mxu0 0.0
    %1274 = vmatprep.subr.mxu0 0.0
    %1275 = vmatpush1.msra.mxu0 0.0
    %1276 = vmatprep.subr.mxu0 0.0
    %1277 = vmatpush1.msra.mxu0 0.0
    %1278 = vmatprep.subr.mxu0 0.0
    %1279 = vmatpush1.msra.mxu0 0.0
    %1280 = vmatprep.subr.mxu0 0.0
    %1281 = vmatpush1.msra.mxu0 0.0
    %1282 = vmatprep.mubr.f32.mxu0 0.0
    %v1283 = vand.u32 %v682, 4294901760
    %1284 = vmatmul.mubr.f32.gmra.mrb[0].mxu0 %v1283
    %v1285 = vpop.f32.mrb[0].mxu0
    %v1286 = vadd.f32 %v1193, %v1285
    %v1287 = vpop.f32.mrb[0].mxu0
    %1288 = vmatprep.mubr.f32.mxu0 0.0
    %v1289 = vand.u32 %v685, 4294901760
    %1290 = vmatmul.mubr.f32.gmra.mrb[0].mxu0 %v1289
    %v1291 = vpop.f32.mrb[0].mxu0
    %v1292 = vadd.f32 %v1199, %v1291
    %v1293 = vpop.f32.mrb[0].mxu0
    %1294 = vmatprep.mubr.f32.mxu0 0.0
    %v1295 = vand.u32 %v688, 4294901760
    %1296 = vmatmul.mubr.f32.gmra.mrb[0].mxu0 %v1295
    %v1297 = vpop.f32.mrb[0].mxu0
    %v1298 = vadd.f32 %v1205, %v1297
    %v1299 = vpop.f32.mrb[0].mxu0
    %1300 = vmatprep.mubr.f32.mxu0 0.0
    %v1301 = vand.u32 %v691, 4294901760
    %1302 = vmatmul.mubr.f32.gmra.mrb[0].mxu0 %v1301
    %v1303 = vpop.f32.mrb[0].mxu0
    %v1304 = vadd.f32 %v1211, %v1303
    %v1305 = vpop.f32.mrb[0].mxu0
    %1306 = vdwg.mxu0
    %v1307 = vmax.f32 %v1286, 0.0
    %v1308 = vmax.f32 %v1292, 0.0
    %v1309 = vmax.f32 %v1298, 0.0
    %v1310 = vmax.f32 %v1304, 0.0
    %v1311 = vld [vmem:[%s5] sm:$0xff]
    %v1312 = vld [vmem:[%s5 + $0x8] sm:$0xff]
    %v1313 = vld [vmem:[%s5 + $0x10] sm:$0xff]
    %v1314 = vld [vmem:[%s5 + $0x18] sm:$0xff]
    %v1315 = vld [vmem:[#allocation2] sm:$0x1]
    %1317 = vset.pattern.permute.xlu0 0
    %1318 = vperm.xlu0 %1317, %v1311
    %v1319 = vpop.permute.xlu0 %1318
    %1322 = vset.pattern.permute.xlu0 0
    %1323 = vperm.xlu0 %1322, %v1312
    %v1324 = vpop.permute.xlu0 %1323
    %1327 = vset.pattern.permute.xlu0 0
    %1328 = vperm.xlu0 %1327, %v1313
    %v1329 = vpop.permute.xlu0 %1328
    %1332 = vset.pattern.permute.xlu0 0
    %1333 = vperm.xlu0 %1332, %v1314
    %v1334 = vpop.permute.xlu0 %1333
    %v1336 = vmul.f32 %v1307, %v1319
    %v1337 = vmul.f32 %v1308, %v1324
    %v1338 = vmul.f32 %v1309, %v1329
    %v1339 = vmul.f32 %v1310, %v1334
    %vm1340 = vcmask 64512
    %v1341 = vsel %vm1340, %v1336, 0.0
    %v1342 = vsel %vm1340, %v1337, 0.0
    %v1343 = vadd.f32 %v1341, %v1342
    %v1344 = vsel %vm1340, %v1338, 0.0
    %v1345 = vadd.f32 %v1343, %v1344
    %v1346 = vsel %vm1340, %v1339, 0.0
    %v1347 = vadd.f32 %v1345, %v1346
    %v1348 = vrot.slane %v1347, 4
    %v1349 = vadd.f32 %v1347, %v1348
    %v1350 = vrot.slane %v1349, 2
    %v1351 = vadd.f32 %v1349, %v1350
    %v1352 = vrot.slane %v1351, 1
    %v1353 = vadd.f32 %v1351, %v1352
    %1355 = vset.pattern.permute.xlu0 0
    %1356 = vperm.xlu0 %1355, %v1315
    %v1357 = vpop.permute.xlu0 %1356
    %v1359 = vlaneseq
    %v1360 = vshrl.u32 %v1359, 7
    %v1361 = vsub.s32 0, %v1360
    %v1362 = vrot.slane %v1357, %v1361
    %v1363 = vadd.f32 %v1353, %v1362
    %vm1364 = vcmask 57344
    %1365 = vst.msk [vmem:[#allocation3] sm:$0x1] %vm1364, %v1363
    // Predicated region
    $region30: #{value_function_forward.1} parent=1 // pred_check
      _
    $region31: #{value_function_forward.1} parent=1 // pred_check_branch
      %1367 = sbr.rel (0) target = $region33
    $region32: #{value_function_forward.1} parent=1 // pred_region
      %s1369 = ssub.s32 16, 16
      %1370 = vsyncadd [#allocation4], %s1369
      %s1372 = sshll.u32 [#allocation3], 4
      %s1373 = int_to_ptr.vmem [resolvable:$true] %s1372
      %1375 = dma.vmem_to_hbm [thread:$0]  %s1373, 16, %s7, [#allocation4]
    $region33: #{value_function_forward.1} parent=1 // pred_fallthru
      _
    // Predicated region
    $region34: #{value_function_forward.1} parent=1 // pred_check
      _
    $region35: #{value_function_forward.1} parent=1 // pred_check_branch
      %1377 = sbr.rel (0) target = $region37
    $region36: #{value_function_forward.1} parent=1 // pred_region
      %1378 = dma.done [#allocation4], 16
    $region37: #{value_function_forward.1} parent=1 // pred_fallthru
      _
    %1379 = vsyncpa [#allocation4], 1

</llo_original>
